<compile_context>
chip_gen: v7x
topology: tpu7x:2x2x1
jax: 0.10.0
libtpu: 0.0.40
codegen_flags: <defaults>
</compile_context>

<pallas_src>
import functools

import jax
import jax.numpy as jnp
from jax.experimental import pallas as pl
from jax.experimental.pallas import tpu as pltpu


def _round_up(a, m):
    return (a + m - 1) // m * m


def _sublane(dtype):
    # Second-to-last block dim must be a multiple of the packed sublane count.
    return {4: 8, 2: 16, 1: 32}[jnp.dtype(dtype).itemsize]


def _vmem_limit_bytes():
    """Generation-dependent VMEM budget: ~75% of physical, capped at 100 MiB."""
    try:
        cap = getattr(pltpu.get_tpu_info(), "vmem_capacity_bytes", None)
    except Exception:
        cap = None
    if not cap:
        cap = 64 * 1024 * 1024  # conservative fallback (v7x physical)
    return int(min(cap * 3 // 4, 100 * 1024 * 1024))


def _softmax_head(x, wo_ref, bo_ref, out_ref):
    """Final linear + softmax over features (exact normalization)."""
    logits = jnp.dot(x.astype(wo_ref.dtype), wo_ref[...],
                     preferred_element_type=jnp.float32)
    logits = logits + bo_ref[...].astype(jnp.float32)          # (1, O_pad) broadcast
    m = jnp.max(logits, axis=-1, keepdims=True)
    e = jnp.exp(logits - m)
    # Exact per-row divide: one value per row, so this costs ~nothing but keeps
    # rows summing to exactly 1 (approx reciprocal here was the old failure).
    out_ref[...] = (e / jnp.sum(e, axis=-1, keepdims=True)).astype(out_ref.dtype)


def _layer_step(x, wcat_l, bcat_l, d):
    """One highway layer on an f32 activation tile. wcat_l: (D, 2D), bcat_l: (1, 2D)."""
    z = jnp.dot(x.astype(wcat_l.dtype), wcat_l, preferred_element_type=jnp.float32)
    z = z + bcat_l.astype(jnp.float32)
    h = jnp.maximum(z[:, :d], 0.0)                 # relu branch (aligned lane split)
    g = 0.5 * jnp.tanh(0.5 * z[:, d:]) + 0.5       # exact sigmoid, single EUP push
    return x + g * (h - x)                         # highway combine (1 fewer mul)
    # TODO(synk): on v6e/v7x the elementwise stage could run in bf16 to halve vreg
    # pressure at tile_b>=256; kept f32 for accuracy.


def _highway_resident_kernel(x_ref, wcat_ref, bcat_ref, wo_ref, bo_ref, out_ref, *,
                             num_layers, d):
    """All layers with weights fully VMEM-resident (small/moderate L*D)."""
    x = x_ref[...].astype(jnp.float32)
    for l in range(num_layers):                    # static, small, trace-time loop
        x = _layer_step(x, wcat_ref[l], bcat_ref[l], d)
    _softmax_head(x, wo_ref, bo_ref, out_ref)


def _highway_streamed_kernel(x_ref, wcat_ref, bcat_ref, wo_ref, bo_ref, out_ref,
                             x_acc, *, d):
    """Layer-streamed variant: grid = (batch_tiles, L), one (D, 2D) weight block
    per step (auto double-buffered -> next layer's DMA overlaps this layer's
    compute), f32 scratch carries the activation across layer steps."""
    l = pl.program_id(1)

    @pl.when(l == 0)
    def _():
        x_acc[...] = x_ref[...].astype(jnp.float32)

    x = _layer_step(x_acc[...], wcat_ref[0], bcat_ref[0], d)
    x_acc[...] = x

    @pl.when(l == pl.num_programs(1) - 1)
    def _():
        _softmax_head(x, wo_ref, bo_ref, out_ref)


def highway_network_forward(x, wn, bn, wg, bg, wo, bo, *,
                            weights_dtype=jnp.bfloat16,
                            max_resident_weight_bytes=None):
    """Full network (highway layers + final linear + softmax) in one pallas_call.

    Parameter layout (PyTorch-equivalent, weights already transposed to in x out):
      wn, wg : (L, D, D)    bn, bg : (L, D)    wo : (D, O)    bo : (O,)
    weights_dtype: MXU storage dtype (default bf16; accumulation stays f32).
    """
    B, D = x.shape
    L = wn.shape[0]
    O = wo.shape[1]
    wdt = jnp.dtype(weights_dtype)

    # Lane-align the feature and output axes (128 lanes).
    D_pad = _round_up(D, 128)
    O_pad = _round_up(O, 128)

    # Fused [Wn | Wg] per layer, zero-padded so the normal/gate split of the
    # (TB, 2*D_pad) pre-activation lands exactly on a lane-tile boundary.
    w_cat = jnp.zeros((L, D_pad, 2 * D_pad), wdt)
    w_cat = w_cat.at[:, :D, :D].set(wn.astype(wdt))
    w_cat = w_cat.at[:, :D, D_pad:D_pad + D].set(wg.astype(wdt))
    b_cat = jnp.zeros((L, 1, 2 * D_pad), jnp.float32)
    b_cat = b_cat.at[:, 0, :D].set(bn.astype(jnp.float32))
    b_cat = b_cat.at[:, 0, D_pad:D_pad + D].set(bg.astype(jnp.float32))
    # Padded feature columns: zero weight + zero bias -> h=0, x stays 0 there.

    # Final linear: zero weight / -1e30 bias in padded output columns so softmax
    # gives them exactly 0 probability; sliced off at the end.
    wo_p = jnp.zeros((D_pad, O_pad), wdt).at[:D, :O].set(wo.astype(wdt))
    bo_p = jnp.full((1, O_pad), -1e30, jnp.float32).at[0, :O].set(
        bo.astype(jnp.float32))

    # Batch tiling: 256-row tiles when B is large (amortize per-step overhead and
    # the MXU weight push); otherwise aim for >=2 tiles so both v7x TensorCores
    # get work under the "parallel" batch axis.
    sub = _sublane(x.dtype)
    if B >= 2 * sub:
        tile_b = min(256, _round_up((B + 1) // 2, sub))
    else:
        tile_b = _round_up(max(B, 1), sub)
    B_pad = _round_up(B, tile_b)
    nb = B_pad // tile_b
    x_p = jnp.zeros((B_pad, D_pad), x.dtype).at[:B, :D].set(x)

    vmem_limit = _vmem_limit_bytes()
    weight_bytes = (w_cat.size * w_cat.dtype.itemsize
                    + b_cat.size * b_cat.dtype.itemsize
                    + wo_p.size * wo_p.dtype.itemsize
                    + bo_p.size * bo_p.dtype.itemsize)
    if max_resident_weight_bytes is None:
        max_resident_weight_bytes = vmem_limit // 2
    stream_layers = weight_bytes > max_resident_weight_bytes

    flops = 2 * B_pad * D_pad * (2 * D_pad) * L + 2 * B_pad * D_pad * O_pad
    transcendentals = B_pad * D_pad * L + B_pad * O_pad
    bytes_accessed = (x_p.size * x_p.dtype.itemsize + weight_bytes
                      + B_pad * O_pad * x.dtype.itemsize)
    cost = pl.CostEstimate(flops=flops, transcendentals=transcendentals,
                           bytes_accessed=bytes_accessed)
    out_shape = jax.ShapeDtypeStruct((B_pad, O_pad), x.dtype)

    if not stream_layers:
        # Weights fully resident across all batch tiles; constant index_map +
        # single buffering (pl.Buffered(1)) so they are not needlessly doubled.
        out_padded = pl.pallas_call(
            functools.partial(_highway_resident_kernel, num_layers=L, d=D_pad),
            out_shape=out_shape,
            grid=(nb,),
            in_specs=[
                pl.BlockSpec((tile_b, D_pad), lambda i: (i, 0)),
                pl.BlockSpec((L, D_pad, 2 * D_pad), lambda i: (0, 0, 0),
                             pipeline_mode=pl.Buffered(1)),
                pl.BlockSpec((L, 1, 2 * D_pad), lambda i: (0, 0, 0),
                             pipeline_mode=pl.Buffered(1)),
                pl.BlockSpec((D_pad, O_pad), lambda i: (0, 0),
                             pipeline_mode=pl.Buffered(1)),
                pl.BlockSpec((1, O_pad), lambda i: (0, 0),
                             pipeline_mode=pl.Buffered(1)),
            ],
            out_specs=pl.BlockSpec((tile_b, O_pad), lambda i: (i, 0)),
            compiler_params=pltpu.CompilerParams(
                dimension_semantics=("parallel",),
                vmem_limit_bytes=vmem_limit),
            cost_estimate=cost,
        )(x_p, w_cat, b_cat, wo_p, bo_p)
    else:
        # Layer-streamed: resident footprint stays ~2 layer blocks regardless of L.
        out_padded = pl.pallas_call(
            functools.partial(_highway_streamed_kernel, d=D_pad),
            out_shape=out_shape,
            grid=(nb, L),
            in_specs=[
                pl.BlockSpec((tile_b, D_pad), lambda i, l: (i, 0)),
                pl.BlockSpec((1, D_pad, 2 * D_pad), lambda i, l: (l, 0, 0)),
                pl.BlockSpec((1, 1, 2 * D_pad), lambda i, l: (l, 0, 0)),
                pl.BlockSpec((D_pad, O_pad), lambda i, l: (0, 0),
                             pipeline_mode=pl.Buffered(1)),
                pl.BlockSpec((1, O_pad), lambda i, l: (0, 0),
                             pipeline_mode=pl.Buffered(1)),
            ],
            out_specs=pl.BlockSpec((tile_b, O_pad), lambda i, l: (i, 0)),
            scratch_shapes=[pltpu.VMEM((tile_b, D_pad), jnp.float32)],
            compiler_params=pltpu.CompilerParams(
                dimension_semantics=("parallel", "arbitrary"),
                vmem_limit_bytes=vmem_limit),
            cost_estimate=cost,
        )(x_p, w_cat, b_cat, wo_p, bo_p)

    return out_padded[:B, :O]


def init_params(key, input_size, output_size, highway_size, gate_bias=-1.0):
    """PyTorch nn.Linear-style init (uniform +-1/sqrt(fan_in)); gate bias filled
    with `gate_bias` as in HighwayNetworkModule.__init__."""
    keys = jax.random.split(key, 3 * highway_size + 2)
    bound = 1.0 / jnp.sqrt(jnp.float32(input_size))

    wn = jnp.stack([
        jax.random.uniform(keys[3 * l + 0], (input_size, input_size),
                           jnp.float32, -bound, bound)
        for l in range(highway_size)
    ])
    bn = jnp.stack([
        jax.random.uniform(keys[3 * l + 1], (input_size,),
                           jnp.float32, -bound, bound)
        for l in range(highway_size)
    ])
    wg = jnp.stack([
        jax.random.uniform(keys[3 * l + 2], (input_size, input_size),
                           jnp.float32, -bound, bound)
        for l in range(highway_size)
    ])
    bg = jnp.full((highway_size, input_size), gate_bias, jnp.float32)

    wo = jax.random.uniform(keys[-2], (input_size, output_size),
                            jnp.float32, -bound, bound)
    bo = jax.random.uniform(keys[-1], (output_size,),
                            jnp.float32, -bound, bound)
    return wn, bn, wg, bg, wo, bo


def reference_forward(x, wn, bn, wg, bg, wo, bo):
    """Pure-JAX reference matching the PyTorch module semantics."""
    h = x
    for l in range(wn.shape[0]):
        normal = jax.nn.relu(h @ wn[l] + bn[l])
        gate = jax.nn.sigmoid(h @ wg[l] + bg[l])
        h = normal * gate + (1.0 - gate) * h
    logits = h @ wo + bo
    return jax.nn.softmax(logits, axis=-1)


if __name__ == "__main__":
    # Small deterministic example: x is a 2-D [batch, input_size] tensor fed
    # through nn.Linear layers, final softmax over output features.
    batch = 8
    input_size = 32
    output_size = 16
    highway_size = 3

    key = jax.random.PRNGKey(0)
    k_x, k_p = jax.random.split(key)
    x = jax.random.normal(k_x, (batch, input_size), jnp.float32)
    params = init_params(k_p, input_size, output_size, highway_size, gate_bias=-1.0)
    ref = reference_forward(x, *params)

    # 1) f32 weights (resident path): must match the pure-JAX reference tightly.
    out_f32 = jax.block_until_ready(
        highway_network_forward(x, *params, weights_dtype=jnp.float32))
    assert out_f32.shape == (batch, output_size)
    assert jnp.allclose(out_f32, ref, atol=1e-4, rtol=1e-4), "f32 mismatch vs reference"
    assert jnp.allclose(jnp.sum(out_f32, axis=-1), 1.0, atol=1e-4), \
        "softmax rows must sum to 1"

    # 2) Default bf16 MXU weights (f32 accumulation): looser tolerance.
    out_bf16 = jax.block_until_ready(highway_network_forward(x, *params))
    assert out_bf16.shape == (batch, output_size)
    assert jnp.allclose(out_bf16, ref, atol=3e-2, rtol=3e-2), "bf16 mismatch vs reference"
    assert jnp.allclose(jnp.sum(out_bf16, axis=-1), 1.0, atol=1e-4), \
        "softmax rows must sum to 1"

    # 3) Force the layer-streamed path (what production-sized D takes on v7x).
    out_stream = jax.block_until_ready(
        highway_network_forward(x, *params, weights_dtype=jnp.float32,
                                max_resident_weight_bytes=0))
    assert jnp.allclose(out_stream, ref, atol=1e-4, rtol=1e-4), \
        "streamed-path mismatch vs reference"

    print("KERNEL_OK")
</pallas_src>

<mosaic_0001>
module attributes {stable_mosaic.version = 11 : i64} {
  func.func @_highway_resident_kernel(%arg0: i32, %arg1: memref<8x128xf32, #tpu.memory_space<vmem>>, %arg2: memref<3x128x256xf32, #tpu.memory_space<vmem>>, %arg3: memref<3x1x256xf32, #tpu.memory_space<vmem>>, %arg4: memref<128x128xf32, #tpu.memory_space<vmem>>, %arg5: memref<1x128xf32, #tpu.memory_space<vmem>>, %arg6: memref<8x128xf32, #tpu.memory_space<vmem>>) attributes {dimension_semantics = [#tpu.dimension_semantics<parallel>], iteration_bounds = array<i64: 1>, scalar_prefetch = 0 : i64, scratch_operands = 0 : i64, tpu.core_type = #tpu.core_type<tc>, window_params = [{transform_indices = @transform_0, window_bounds = array<i64: 8, 128>}, {pipeline_mode = #tpu.pipeline_mode<synchronous>, transform_indices = @transform_1, window_bounds = array<i64: 3, 128, 256>}, {pipeline_mode = #tpu.pipeline_mode<synchronous>, transform_indices = @transform_2, window_bounds = array<i64: 3, 1, 256>}, {pipeline_mode = #tpu.pipeline_mode<synchronous>, transform_indices = @transform_3, window_bounds = array<i64: 128, 128>}, {pipeline_mode = #tpu.pipeline_mode<synchronous>, transform_indices = @transform_4, window_bounds = array<i64: 1, 128>}, {transform_indices = @transform_5, window_bounds = array<i64: 8, 128>}]} {
    %c0 = arith.constant 0 : index
    %c0_0 = arith.constant 0 : index
    %0 = vector.load %arg1[%c0, %c0_0] : memref<8x128xf32, #tpu.memory_space<vmem>>, vector<8x128xf32>
    %c0_1 = arith.constant 0 : index
    %c0_2 = arith.constant 0 : index
    %c0_3 = arith.constant 0 : index
    %1 = vector.load %arg2[%c0_1, %c0_2, %c0_3] : memref<3x128x256xf32, #tpu.memory_space<vmem>>, vector<1x128x256xf32>
    %2 = vector.shape_cast %1 : vector<1x128x256xf32> to vector<128x256xf32>
    %c0_4 = arith.constant 0 : index
    %c0_5 = arith.constant 0 : index
    %c0_6 = arith.constant 0 : index
    %3 = vector.load %arg3[%c0_4, %c0_5, %c0_6] : memref<3x1x256xf32, #tpu.memory_space<vmem>>, vector<1x1x256xf32>
    %4 = vector.shape_cast %3 : vector<1x1x256xf32> to vector<1x256xf32>
    %cst = arith.constant dense<0.000000e+00> : vector<8x256xf32>
    %5 = tpu.matmul %0, %2, %cst {dimension_numbers = #tpu.dot_dimension_numbers<[1], [0], [0], [1], [0, 0, 1, 1], [], []>} : vector<8x128xf32>, vector<128x256xf32>, vector<8x256xf32> -> vector<8x256xf32>
    %6 = vector.broadcast %4 : vector<1x256xf32> to vector<8x256xf32>
    %7 = arith.addf %5, %6 : vector<8x256xf32>
    %8 = vector.extract_strided_slice %7 {offsets = [0, 0], sizes = [8, 128], strides = [1, 1]} : vector<8x256xf32> to vector<8x128xf32>
    %cst_7 = arith.constant 0.000000e+00 : f32
    %9 = vector.broadcast %cst_7 : f32 to vector<8x128xf32>
    %10 = arith.maximumf %8, %9 : vector<8x128xf32>
    %11 = vector.extract_strided_slice %7 {offsets = [0, 128], sizes = [8, 128], strides = [1, 1]} : vector<8x256xf32> to vector<8x128xf32>
    %cst_8 = arith.constant 5.000000e-01 : f32
    %12 = vector.broadcast %cst_8 : f32 to vector<8x128xf32>
    %13 = arith.mulf %12, %11 : vector<8x128xf32>
    %14 = math.tanh %13 : vector<8x128xf32>
    %cst_9 = arith.constant 5.000000e-01 : f32
    %15 = vector.broadcast %cst_9 : f32 to vector<8x128xf32>
    %16 = arith.mulf %15, %14 : vector<8x128xf32>
    %cst_10 = arith.constant 5.000000e-01 : f32
    %17 = vector.broadcast %cst_10 : f32 to vector<8x128xf32>
    %18 = arith.addf %16, %17 : vector<8x128xf32>
    %19 = arith.subf %10, %0 : vector<8x128xf32>
    %20 = arith.mulf %18, %19 : vector<8x128xf32>
    %21 = arith.addf %0, %20 : vector<8x128xf32>
    %c1 = arith.constant 1 : index
    %c0_11 = arith.constant 0 : index
    %c0_12 = arith.constant 0 : index
    %22 = vector.load %arg2[%c1, %c0_11, %c0_12] : memref<3x128x256xf32, #tpu.memory_space<vmem>>, vector<1x128x256xf32>
    %23 = vector.shape_cast %22 : vector<1x128x256xf32> to vector<128x256xf32>
    %c1_13 = arith.constant 1 : index
    %c0_14 = arith.constant 0 : index
    %c0_15 = arith.constant 0 : index
    %24 = vector.load %arg3[%c1_13, %c0_14, %c0_15] : memref<3x1x256xf32, #tpu.memory_space<vmem>>, vector<1x1x256xf32>
    %25 = vector.shape_cast %24 : vector<1x1x256xf32> to vector<1x256xf32>
    %cst_16 = arith.constant dense<0.000000e+00> : vector<8x256xf32>
    %26 = tpu.matmul %21, %23, %cst_16 {dimension_numbers = #tpu.dot_dimension_numbers<[1], [0], [0], [1], [0, 0, 1, 1], [], []>} : vector<8x128xf32>, vector<128x256xf32>, vector<8x256xf32> -> vector<8x256xf32>
    %27 = vector.broadcast %25 : vector<1x256xf32> to vector<8x256xf32>
    %28 = arith.addf %26, %27 : vector<8x256xf32>
    %29 = vector.extract_strided_slice %28 {offsets = [0, 0], sizes = [8, 128], strides = [1, 1]} : vector<8x256xf32> to vector<8x128xf32>
    %cst_17 = arith.constant 0.000000e+00 : f32
    %30 = vector.broadcast %cst_17 : f32 to vector<8x128xf32>
    %31 = arith.maximumf %29, %30 : vector<8x128xf32>
    %32 = vector.extract_strided_slice %28 {offsets = [0, 128], sizes = [8, 128], strides = [1, 1]} : vector<8x256xf32> to vector<8x128xf32>
    %cst_18 = arith.constant 5.000000e-01 : f32
    %33 = vector.broadcast %cst_18 : f32 to vector<8x128xf32>
    %34 = arith.mulf %33, %32 : vector<8x128xf32>
    %35 = math.tanh %34 : vector<8x128xf32>
    %cst_19 = arith.constant 5.000000e-01 : f32
    %36 = vector.broadcast %cst_19 : f32 to vector<8x128xf32>
    %37 = arith.mulf %36, %35 : vector<8x128xf32>
    %cst_20 = arith.constant 5.000000e-01 : f32
    %38 = vector.broadcast %cst_20 : f32 to vector<8x128xf32>
    %39 = arith.addf %37, %38 : vector<8x128xf32>
    %40 = arith.subf %31, %21 : vector<8x128xf32>
    %41 = arith.mulf %39, %40 : vector<8x128xf32>
    %42 = arith.addf %21, %41 : vector<8x128xf32>
    %c2 = arith.constant 2 : index
    %c0_21 = arith.constant 0 : index
    %c0_22 = arith.constant 0 : index
    %43 = vector.load %arg2[%c2, %c0_21, %c0_22] : memref<3x128x256xf32, #tpu.memory_space<vmem>>, vector<1x128x256xf32>
    %44 = vector.shape_cast %43 : vector<1x128x256xf32> to vector<128x256xf32>
    %c2_23 = arith.constant 2 : index
    %c0_24 = arith.constant 0 : index
    %c0_25 = arith.constant 0 : index
    %45 = vector.load %arg3[%c2_23, %c0_24, %c0_25] : memref<3x1x256xf32, #tpu.memory_space<vmem>>, vector<1x1x256xf32>
    %46 = vector.shape_cast %45 : vector<1x1x256xf32> to vector<1x256xf32>
    %cst_26 = arith.constant dense<0.000000e+00> : vector<8x256xf32>
    %47 = tpu.matmul %42, %44, %cst_26 {dimension_numbers = #tpu.dot_dimension_numbers<[1], [0], [0], [1], [0, 0, 1, 1], [], []>} : vector<8x128xf32>, vector<128x256xf32>, vector<8x256xf32> -> vector<8x256xf32>
    %48 = vector.broadcast %46 : vector<1x256xf32> to vector<8x256xf32>
    %49 = arith.addf %47, %48 : vector<8x256xf32>
    %50 = vector.extract_strided_slice %49 {offsets = [0, 0], sizes = [8, 128], strides = [1, 1]} : vector<8x256xf32> to vector<8x128xf32>
    %cst_27 = arith.constant 0.000000e+00 : f32
    %51 = vector.broadcast %cst_27 : f32 to vector<8x128xf32>
    %52 = arith.maximumf %50, %51 : vector<8x128xf32>
    %53 = vector.extract_strided_slice %49 {offsets = [0, 128], sizes = [8, 128], strides = [1, 1]} : vector<8x256xf32> to vector<8x128xf32>
    %cst_28 = arith.constant 5.000000e-01 : f32
    %54 = vector.broadcast %cst_28 : f32 to vector<8x128xf32>
    %55 = arith.mulf %54, %53 : vector<8x128xf32>
    %56 = math.tanh %55 : vector<8x128xf32>
    %cst_29 = arith.constant 5.000000e-01 : f32
    %57 = vector.broadcast %cst_29 : f32 to vector<8x128xf32>
    %58 = arith.mulf %57, %56 : vector<8x128xf32>
    %cst_30 = arith.constant 5.000000e-01 : f32
    %59 = vector.broadcast %cst_30 : f32 to vector<8x128xf32>
    %60 = arith.addf %58, %59 : vector<8x128xf32>
    %61 = arith.subf %52, %42 : vector<8x128xf32>
    %62 = arith.mulf %60, %61 : vector<8x128xf32>
    %63 = arith.addf %42, %62 : vector<8x128xf32>
    %c0_31 = arith.constant 0 : index
    %c0_32 = arith.constant 0 : index
    %64 = vector.load %arg4[%c0_31, %c0_32] : memref<128x128xf32, #tpu.memory_space<vmem>>, vector<128x128xf32>
    %cst_33 = arith.constant dense<0.000000e+00> : vector<8x128xf32>
    %65 = tpu.matmul %63, %64, %cst_33 {dimension_numbers = #tpu.dot_dimension_numbers<[1], [0], [0], [1], [0, 0, 1, 1], [], []>} : vector<8x128xf32>, vector<128x128xf32>, vector<8x128xf32> -> vector<8x128xf32>
    %c0_34 = arith.constant 0 : index
    %c0_35 = arith.constant 0 : index
    %66 = vector.load %arg5[%c0_34, %c0_35] : memref<1x128xf32, #tpu.memory_space<vmem>>, vector<1x128xf32>
    %67 = vector.broadcast %66 : vector<1x128xf32> to vector<8x128xf32>
    %68 = arith.addf %65, %67 : vector<8x128xf32>
    %cst_36 = arith.constant dense<0xFF800000> : vector<8xf32>
    %69 = vector.multi_reduction <maximumf>, %68, %cst_36 [1] : vector<8x128xf32> to vector<8xf32>
    %70 = vector.shape_cast %69 : vector<8xf32> to vector<8x1xf32>
    %71 = vector.broadcast %70 : vector<8x1xf32> to vector<8x128xf32>
    %72 = arith.subf %68, %71 : vector<8x128xf32>
    %73 = math.exp %72 : vector<8x128xf32>
    %cst_37 = arith.constant dense<0.000000e+00> : vector<8xf32>
    %74 = vector.multi_reduction <add>, %73, %cst_37 [1] : vector<8x128xf32> to vector<8xf32>
    %75 = vector.shape_cast %74 : vector<8xf32> to vector<8x1xf32>
    %76 = vector.broadcast %75 : vector<8x1xf32> to vector<8x128xf32>
    %77 = arith.divf %73, %76 : vector<8x128xf32>
    %c0_38 = arith.constant 0 : index
    %c0_39 = arith.constant 0 : index
    %78 = vector.load %arg6[%c0_38, %c0_39] : memref<8x128xf32, #tpu.memory_space<vmem>>, vector<8x128xf32>
    tpu.vector_store %arg6[%c0_38, %c0_39], %77 {strides = array<i32>} : memref<8x128xf32, #tpu.memory_space<vmem>>, vector<8x128xf32>,
    return
  }
  func.func @transform_0(%arg0: i32) -> (i32, i32) {
    %c0_i32 = arith.constant 0 : i32
    %c0_i32_0 = arith.constant 0 : i32
    return %arg0, %c0_i32 : i32, i32
  }
  func.func @transform_1(%arg0: i32) -> (i32, i32, i32) {
    %c0_i32 = arith.constant 0 : i32
    %c0_i32_0 = arith.constant 0 : i32
    %c0_i32_1 = arith.constant 0 : i32
    %c0_i32_2 = arith.constant 0 : i32
    return %c0_i32, %c0_i32_0, %c0_i32_1 : i32, i32, i32
  }
  func.func @transform_2(%arg0: i32) -> (i32, i32, i32) {
    %c0_i32 = arith.constant 0 : i32
    %c0_i32_0 = arith.constant 0 : i32
    %c0_i32_1 = arith.constant 0 : i32
    %c0_i32_2 = arith.constant 0 : i32
    return %c0_i32, %c0_i32_0, %c0_i32_1 : i32, i32, i32
  }
  func.func @transform_3(%arg0: i32) -> (i32, i32) {
    %c0_i32 = arith.constant 0 : i32
    %c0_i32_0 = arith.constant 0 : i32
    %c0_i32_1 = arith.constant 0 : i32
    return %c0_i32, %c0_i32_0 : i32, i32
  }
  func.func @transform_4(%arg0: i32) -> (i32, i32) {
    %c0_i32 = arith.constant 0 : i32
    %c0_i32_0 = arith.constant 0 : i32
    %c0_i32_1 = arith.constant 0 : i32
    return %c0_i32, %c0_i32_0 : i32, i32
  }
  func.func @transform_5(%arg0: i32) -> (i32, i32) {
    %c0_i32 = arith.constant 0 : i32
    %c0_i32_0 = arith.constant 0 : i32
    return %arg0, %c0_i32 : i32, i32
  }
}

</mosaic_0001>

<llo_original>
// kernel: tpu_custom_call.1
$region0: #{tpu_custom_call.1}
  #allocation0 [shape = 'u32[]', space=smem, size = 0x4, offset = 0x4, fixed_abs, tag = 'smem constant byte address 0x4 - core index']
  #allocation1 [shape = 'u32[144,128]{1,0:T(1,128)}', space=vmem, size = 0x12000, scoped, tag = 'internal scratch']
  %s0 = inlined_call_operand.hbm [shape: f32[8,128], index: 0, kind: input, shape index: {}]
  %s1 = inlined_call_operand.hbm [shape: f32[3,128,256], index: 1, kind: input, shape index: {}]
  %s2 = inlined_call_operand.vmem [shape: f32[3,1,256], index: 2, kind: input, shape index: {}]
  %s3 = inlined_call_operand.hbm [shape: f32[128,128], index: 3, kind: input, shape index: {}]
  %s4 = inlined_call_operand.vmem [shape: f32[1,128], index: 4, kind: input, shape index: {}]
  %s5 = inlined_call_operand.hbm [shape: f32[8,128], index: 5, kind: output, shape index: {}]
  %s6 = sld [smem:[#allocation0]]
  $region42: #{tpu_custom_call.1} parent=0
    _
  %s8 = ssub.s32 1, %s6
  %s9 = scalar_select 0, %s8, %s6
  $region1: #{tpu_custom_call.1} parent=0
    #allocation2 [shape = 'u8[4096]{0}', space=vmem, size = 0x1000, scoped, tag = 'input window, operand 0, single buffered']
    #allocation3 [shape = 's32[1]{0}', space=sflag, size = 0x4, scoped, tag = 'scoped memory for tpu_custom_call.1']
    #allocation4 [shape = 's32[1]{0}', space=sflag, size = 0x4, scoped, tag = 'scoped memory for tpu_custom_call.1']
    #allocation5 [shape = 'u8[393216]{0}', space=vmem, size = 0x60000, scoped, tag = 'input window, operand 1, single buffered']
    #allocation6 [shape = 's32[1]{0}', space=sflag, size = 0x4, scoped, tag = 'scoped memory for tpu_custom_call.1']
    #allocation7 [shape = 'u8[65536]{0}', space=vmem, size = 0x10000, scoped, tag = 'input window, operand 3, single buffered']
    #allocation8 [shape = 'u8[4096]{0}', space=vmem, size = 0x1000, scoped, tag = 'output window, operand 0, single buffered']
    %10 = vsyncpa [#allocation3], 0
    %11 = vsyncpa [#allocation6], 0
    %12 = vsyncpa [#allocation4], 0
    // Predicated region
    $region2: #{tpu_custom_call.1} parent=1 // pred_check
      _
    $region3: #{tpu_custom_call.1} parent=1 // pred_check_branch
      %14 = sbr.rel (0) target = $region5
    $region4: #{tpu_custom_call.1} parent=1 // pred_region
      %s16 = ssub.s32 128, 128
      %17 = vsyncadd [#allocation3], %s16
      %s19 = sshll.u32 [#allocation2], 4
      %s20 = int_to_ptr.vmem [resolvable:$true] %s19
      %22 = dma.hbm_to_vmem [thread:$0]  %s0, 128, %s20, [#allocation3]
    $region5: #{tpu_custom_call.1} parent=1 // pred_fallthru
      _
    // Predicated region
    $region6: #{tpu_custom_call.1} parent=1 // pred_check
      _
    $region7: #{tpu_custom_call.1} parent=1 // pred_check_branch
      %24 = sbr.rel (0) target = $region9
    $region8: #{tpu_custom_call.1} parent=1 // pred_region
      %s26 = ssub.s32 12288, 12288
      %27 = vsyncadd [#allocation6], %s26
      %s28 = sshll.u32 [#allocation5], 4
      %s29 = int_to_ptr.vmem [resolvable:$true] %s28
      %34 = dma.hbm_to_vmem [thread:$0]  %s1, 12288, %s29, [#allocation6], 256, 256, 16
    $region9: #{tpu_custom_call.1} parent=1 // pred_fallthru
      _
    // Predicated region
    $region10: #{tpu_custom_call.1} parent=1 // pred_check
      _
    $region11: #{tpu_custom_call.1} parent=1 // pred_check_branch
      %36 = sbr.rel (0) target = $region13
    $region12: #{tpu_custom_call.1} parent=1 // pred_region
      _
    $region13: #{tpu_custom_call.1} parent=1 // pred_fallthru
      _
    // Predicated region
    $region14: #{tpu_custom_call.1} parent=1 // pred_check
      _
    $region15: #{tpu_custom_call.1} parent=1 // pred_check_branch
      %38 = sbr.rel (0) target = $region17
    $region16: #{tpu_custom_call.1} parent=1 // pred_region
      %s40 = ssub.s32 2048, 2048
      %41 = vsyncadd [#allocation6], %s40
      %s42 = sshll.u32 [#allocation7], 4
      %s43 = int_to_ptr.vmem [resolvable:$true] %s42
      %48 = dma.hbm_to_vmem [thread:$0]  %s3, 2048, %s43, [#allocation6], 128, 128, 8
    $region17: #{tpu_custom_call.1} parent=1 // pred_fallthru
      _
    // Predicated region
    $region18: #{tpu_custom_call.1} parent=1 // pred_check
      _
    $region19: #{tpu_custom_call.1} parent=1 // pred_check_branch
      %50 = sbr.rel (0) target = $region21
    $region20: #{tpu_custom_call.1} parent=1 // pred_region
      _
    $region21: #{tpu_custom_call.1} parent=1 // pred_fallthru
      _
    // Predicated region
    $region22: #{tpu_custom_call.1} parent=1 // pred_check
      _
    $region23: #{tpu_custom_call.1} parent=1 // pred_check_branch
      %52 = sbr.rel (0) target = $region25
    $region24: #{tpu_custom_call.1} parent=1 // pred_region
      %53 = dma.done [#allocation3], 128
    $region25: #{tpu_custom_call.1} parent=1 // pred_fallthru
      _
    // Predicated region
    $region26: #{tpu_custom_call.1} parent=1 // pred_check
      _
    $region27: #{tpu_custom_call.1} parent=1 // pred_check_branch
      %55 = sbr.rel (0) target = $region29
    $region28: #{tpu_custom_call.1} parent=1 // pred_region
      %56 = dma.done [#allocation6], 12288
    $region29: #{tpu_custom_call.1} parent=1 // pred_fallthru
      _
    // Predicated region
    $region30: #{tpu_custom_call.1} parent=1 // pred_check
      _
    $region31: #{tpu_custom_call.1} parent=1 // pred_check_branch
      %58 = sbr.rel (0) target = $region33
    $region32: #{tpu_custom_call.1} parent=1 // pred_region
      %59 = dma.done [#allocation6], 2048
    $region33: #{tpu_custom_call.1} parent=1 // pred_fallthru
      _
    %v60 = vld [vmem:[#allocation2] sm:$0xff]
    %v61 = vld [vmem:[#allocation5] sm:$0xff]
    %v62 = vld [vmem:[#allocation5 + $0x8] sm:$0xff]
    %v63 = vld [vmem:[#allocation5 + $0x10] sm:$0xff]
    %v64 = vld [vmem:[#allocation5 + $0x18] sm:$0xff]
    %v65 = vld [vmem:[#allocation5 + $0x20] sm:$0xff]
    %v66 = vld [vmem:[#allocation5 + $0x28] sm:$0xff]
    %v67 = vld [vmem:[#allocation5 + $0x30] sm:$0xff]
    %v68 = vld [vmem:[#allocation5 + $0x38] sm:$0xff]
    %v69 = vld [vmem:[#allocation5 + $0x40] sm:$0xff]
    %v70 = vld [vmem:[#allocation5 + $0x48] sm:$0xff]
    %v71 = vld [vmem:[#allocation5 + $0x50] sm:$0xff]
    %v72 = vld [vmem:[#allocation5 + $0x58] sm:$0xff]
    %v73 = vld [vmem:[#allocation5 + $0x60] sm:$0xff]
    %v74 = vld [vmem:[#allocation5 + $0x68] sm:$0xff]
    %v75 = vld [vmem:[#allocation5 + $0x70] sm:$0xff]
    %v76 = vld [vmem:[#allocation5 + $0x78] sm:$0xff]
    %v77 = vld [vmem:[#allocation5 + $0x80] sm:$0xff]
    %v78 = vld [vmem:[#allocation5 + $0x88] sm:$0xff]
    %v79 = vld [vmem:[#allocation5 + $0x90] sm:$0xff]
    %v80 = vld [vmem:[#allocation5 + $0x98] sm:$0xff]
    %v81 = vld [vmem:[#allocation5 + $0xa0] sm:$0xff]
    %v82 = vld [vmem:[#allocation5 + $0xa8] sm:$0xff]
    %v83 = vld [vmem:[#allocation5 + $0xb0] sm:$0xff]
    %v84 = vld [vmem:[#allocation5 + $0xb8] sm:$0xff]
    %v85 = vld [vmem:[#allocation5 + $0xc0] sm:$0xff]
    %v86 = vld [vmem:[#allocation5 + $0xc8] sm:$0xff]
    %v87 = vld [vmem:[#allocation5 + $0xd0] sm:$0xff]
    %v88 = vld [vmem:[#allocation5 + $0xd8] sm:$0xff]
    %v89 = vld [vmem:[#allocation5 + $0xe0] sm:$0xff]
    %v90 = vld [vmem:[#allocation5 + $0xe8] sm:$0xff]
    %v91 = vld [vmem:[#allocation5 + $0xf0] sm:$0xff]
    %v92 = vld [vmem:[#allocation5 + $0xf8] sm:$0xff]
    %v93 = vld [vmem:[%s2] sm:$0x3]
    %v95 = vlaneseq
    %v96 = vshrl.u32 %v95, 7
    %v97 = vsub.s32 0, %v96
    %v98 = vrot.slane %v93, %v97
    %v99 = vlaneseq
    %v100 = vshrl.u32 %v99, 7
    %v101 = vsub.s32 1, %v100
    %v102 = vrot.slane %v93, %v101
    %105 = vmatprep.subr.mxu0 %v62
    %106 = vmatpush1.msra.mxu0 %v61
    %107 = vmatprep.subr.mxu0 %v64
    %108 = vmatpush1.msra.mxu0 %v63
    %109 = vmatprep.subr.mxu0 %v66
    %110 = vmatpush1.msra.mxu0 %v65
    %111 = vmatprep.subr.mxu0 %v68
    %112 = vmatpush1.msra.mxu0 %v67
    %113 = vmatprep.subr.mxu0 %v70
    %114 = vmatpush1.msra.mxu0 %v69
    %115 = vmatprep.subr.mxu0 %v72
    %116 = vmatpush1.msra.mxu0 %v71
    %117 = vmatprep.subr.mxu0 %v74
    %118 = vmatpush1.msra.mxu0 %v73
    %119 = vmatprep.subr.mxu0 %v76
    %120 = vmatpush1.msra.mxu0 %v75
    %121 = vmatprep.subr.mxu0 %v78
    %122 = vmatpush1.msra.mxu0 %v77
    %123 = vmatprep.subr.mxu0 %v80
    %124 = vmatpush1.msra.mxu0 %v79
    %125 = vmatprep.subr.mxu0 %v82
    %126 = vmatpush1.msra.mxu0 %v81
    %127 = vmatprep.subr.mxu0 %v84
    %128 = vmatpush1.msra.mxu0 %v83
    %129 = vmatprep.subr.mxu0 %v86
    %130 = vmatpush1.msra.mxu0 %v85
    %131 = vmatprep.subr.mxu0 %v88
    %132 = vmatpush1.msra.mxu0 %v87
    %133 = vmatprep.subr.mxu0 %v90
    %134 = vmatpush1.msra.mxu0 %v89
    %135 = vmatprep.subr.mxu0 %v92
    %136 = vmatpush1.msra.mxu0 %v91
    %137 = vmatprep.subr.mxu0 0.0
    %138 = vmatpush1.msra.mxu0 0.0
    %139 = vmatprep.subr.mxu0 0.0
    %140 = vmatpush1.msra.mxu0 0.0
    %141 = vmatprep.subr.mxu0 0.0
    %142 = vmatpush1.msra.mxu0 0.0
    %143 = vmatprep.subr.mxu0 0.0
    %144 = vmatpush1.msra.mxu0 0.0
    %145 = vmatprep.subr.mxu0 0.0
    %146 = vmatpush1.msra.mxu0 0.0
    %147 = vmatprep.subr.mxu0 0.0
    %148 = vmatpush1.msra.mxu0 0.0
    %149 = vmatprep.subr.mxu0 0.0
    %150 = vmatpush1.msra.mxu0 0.0
    %151 = vmatprep.subr.mxu0 0.0
    %152 = vmatpush1.msra.mxu0 0.0
    %153 = vmatprep.subr.mxu0 0.0
    %154 = vmatpush1.msra.mxu0 0.0
    %155 = vmatprep.subr.mxu0 0.0
    %156 = vmatpush1.msra.mxu0 0.0
    %157 = vmatprep.subr.mxu0 0.0
    %158 = vmatpush1.msra.mxu0 0.0
    %159 = vmatprep.subr.mxu0 0.0
    %160 = vmatpush1.msra.mxu0 0.0
    %161 = vmatprep.subr.mxu0 0.0
    %162 = vmatpush1.msra.mxu0 0.0
    %163 = vmatprep.subr.mxu0 0.0
    %164 = vmatpush1.msra.mxu0 0.0
    %165 = vmatprep.subr.mxu0 0.0
    %166 = vmatpush1.msra.mxu0 0.0
    %167 = vmatprep.subr.mxu0 0.0
    %168 = vmatpush1.msra.mxu0 0.0
    %169 = vmatprep.mubr.f32.mxu0 0.0
    %170 = vmatmul.mubr.f32.gmra.mrb[0].mxu0 %v60
    %v171 = vpop.f32.mrb[0].mxu0
    %v172 = vadd.f32 %v98, %v171
    %v173 = vpop.f32.mrb[0].mxu0
    %v174 = vadd.f32 %v102, %v173
    %175 = vdwg.mxu0
    %v176 = vmax.f32 %v172, 0.0
    %v177 = vmul.f32 %v174, 0.5
    %v178 = vtanh.pop %v177
    %v179 = vmul.f32 %v178, 0.5
    %v180 = vadd.f32 %v179, 0.5
    %v181 = vsub.f32 %v176, %v60
    %v182 = vmul.f32 %v180, %v181
    %v183 = vadd.f32 %v60, %v182
    %s184 = scalar_lea.vmem [#allocation5], 256
    %v185 = vld [vmem:[%s184] sm:$0xff]
    %v186 = vld [vmem:[%s184 + $0x8] sm:$0xff]
    %v187 = vld [vmem:[%s184 + $0x10] sm:$0xff]
    %v188 = vld [vmem:[%s184 + $0x18] sm:$0xff]
    %v189 = vld [vmem:[%s184 + $0x20] sm:$0xff]
    %v190 = vld [vmem:[%s184 + $0x28] sm:$0xff]
    %v191 = vld [vmem:[%s184 + $0x30] sm:$0xff]
    %v192 = vld [vmem:[%s184 + $0x38] sm:$0xff]
    %v193 = vld [vmem:[%s184 + $0x40] sm:$0xff]
    %v194 = vld [vmem:[%s184 + $0x48] sm:$0xff]
    %v195 = vld [vmem:[%s184 + $0x50] sm:$0xff]
    %v196 = vld [vmem:[%s184 + $0x58] sm:$0xff]
    %v197 = vld [vmem:[%s184 + $0x60] sm:$0xff]
    %v198 = vld [vmem:[%s184 + $0x68] sm:$0xff]
    %v199 = vld [vmem:[%s184 + $0x70] sm:$0xff]
    %v200 = vld [vmem:[%s184 + $0x78] sm:$0xff]
    %v201 = vld [vmem:[%s184 + $0x80] sm:$0xff]
    %v202 = vld [vmem:[%s184 + $0x88] sm:$0xff]
    %v203 = vld [vmem:[%s184 + $0x90] sm:$0xff]
    %v204 = vld [vmem:[%s184 + $0x98] sm:$0xff]
    %v205 = vld [vmem:[%s184 + $0xa0] sm:$0xff]
    %v206 = vld [vmem:[%s184 + $0xa8] sm:$0xff]
    %v207 = vld [vmem:[%s184 + $0xb0] sm:$0xff]
    %v208 = vld [vmem:[%s184 + $0xb8] sm:$0xff]
    %v209 = vld [vmem:[%s184 + $0xc0] sm:$0xff]
    %v210 = vld [vmem:[%s184 + $0xc8] sm:$0xff]
    %v211 = vld [vmem:[%s184 + $0xd0] sm:$0xff]
    %v212 = vld [vmem:[%s184 + $0xd8] sm:$0xff]
    %v213 = vld [vmem:[%s184 + $0xe0] sm:$0xff]
    %v214 = vld [vmem:[%s184 + $0xe8] sm:$0xff]
    %v215 = vld [vmem:[%s184 + $0xf0] sm:$0xff]
    %v216 = vld [vmem:[%s184 + $0xf8] sm:$0xff]
    %s217 = scalar_lea.vmem %s2, 2
    %v218 = vld [vmem:[%s217] sm:$0x3]
    %v220 = vlaneseq
    %v221 = vshrl.u32 %v220, 7
    %v222 = vsub.s32 0, %v221
    %v223 = vrot.slane %v218, %v222
    %v224 = vlaneseq
    %v225 = vshrl.u32 %v224, 7
    %v226 = vsub.s32 1, %v225
    %v227 = vrot.slane %v218, %v226
    %230 = vmatprep.subr.mxu0 %v186
    %231 = vmatpush1.msra.mxu0 %v185
    %232 = vmatprep.subr.mxu0 %v188
    %233 = vmatpush1.msra.mxu0 %v187
    %234 = vmatprep.subr.mxu0 %v190
    %235 = vmatpush1.msra.mxu0 %v189
    %236 = vmatprep.subr.mxu0 %v192
    %237 = vmatpush1.msra.mxu0 %v191
    %238 = vmatprep.subr.mxu0 %v194
    %239 = vmatpush1.msra.mxu0 %v193
    %240 = vmatprep.subr.mxu0 %v196
    %241 = vmatpush1.msra.mxu0 %v195
    %242 = vmatprep.subr.mxu0 %v198
    %243 = vmatpush1.msra.mxu0 %v197
    %244 = vmatprep.subr.mxu0 %v200
    %245 = vmatpush1.msra.mxu0 %v199
    %246 = vmatprep.subr.mxu0 %v202
    %247 = vmatpush1.msra.mxu0 %v201
    %248 = vmatprep.subr.mxu0 %v204
    %249 = vmatpush1.msra.mxu0 %v203
    %250 = vmatprep.subr.mxu0 %v206
    %251 = vmatpush1.msra.mxu0 %v205
    %252 = vmatprep.subr.mxu0 %v208
    %253 = vmatpush1.msra.mxu0 %v207
    %254 = vmatprep.subr.mxu0 %v210
    %255 = vmatpush1.msra.mxu0 %v209
    %256 = vmatprep.subr.mxu0 %v212
    %257 = vmatpush1.msra.mxu0 %v211
    %258 = vmatprep.subr.mxu0 %v214
    %259 = vmatpush1.msra.mxu0 %v213
    %260 = vmatprep.subr.mxu0 %v216
    %261 = vmatpush1.msra.mxu0 %v215
    %262 = vmatprep.subr.mxu0 0.0
    %263 = vmatpush1.msra.mxu0 0.0
    %264 = vmatprep.subr.mxu0 0.0
    %265 = vmatpush1.msra.mxu0 0.0
    %266 = vmatprep.subr.mxu0 0.0
    %267 = vmatpush1.msra.mxu0 0.0
    %268 = vmatprep.subr.mxu0 0.0
    %269 = vmatpush1.msra.mxu0 0.0
    %270 = vmatprep.subr.mxu0 0.0
    %271 = vmatpush1.msra.mxu0 0.0
    %272 = vmatprep.subr.mxu0 0.0
    %273 = vmatpush1.msra.mxu0 0.0
    %274 = vmatprep.subr.mxu0 0.0
    %275 = vmatpush1.msra.mxu0 0.0
    %276 = vmatprep.subr.mxu0 0.0
    %277 = vmatpush1.msra.mxu0 0.0
    %278 = vmatprep.subr.mxu0 0.0
    %279 = vmatpush1.msra.mxu0 0.0
    %280 = vmatprep.subr.mxu0 0.0
    %281 = vmatpush1.msra.mxu0 0.0
    %282 = vmatprep.subr.mxu0 0.0
    %283 = vmatpush1.msra.mxu0 0.0
    %284 = vmatprep.subr.mxu0 0.0
    %285 = vmatpush1.msra.mxu0 0.0
    %286 = vmatprep.subr.mxu0 0.0
    %287 = vmatpush1.msra.mxu0 0.0
    %288 = vmatprep.subr.mxu0 0.0
    %289 = vmatpush1.msra.mxu0 0.0
    %290 = vmatprep.subr.mxu0 0.0
    %291 = vmatpush1.msra.mxu0 0.0
    %292 = vmatprep.subr.mxu0 0.0
    %293 = vmatpush1.msra.mxu0 0.0
    %294 = vmatprep.mubr.f32.mxu0 0.0
    %295 = vmatmul.mubr.f32.gmra.mrb[0].mxu0 %v183
    %v296 = vpop.f32.mrb[0].mxu0
    %v297 = vadd.f32 %v223, %v296
    %v298 = vpop.f32.mrb[0].mxu0
    %v299 = vadd.f32 %v227, %v298
    %300 = vdwg.mxu0
    %v301 = vmax.f32 %v297, 0.0
    %v302 = vmul.f32 %v299, 0.5
    %v303 = vtanh.pop %v302
    %v304 = vmul.f32 %v303, 0.5
    %v305 = vadd.f32 %v304, 0.5
    %v306 = vsub.f32 %v301, %v183
    %v307 = vmul.f32 %v305, %v306
    %v308 = vadd.f32 %v183, %v307
    %s309 = scalar_lea.vmem [#allocation5], 512
    %v310 = vld [vmem:[%s309] sm:$0xff]
    %v311 = vld [vmem:[%s309 + $0x8] sm:$0xff]
    %v312 = vld [vmem:[%s309 + $0x10] sm:$0xff]
    %v313 = vld [vmem:[%s309 + $0x18] sm:$0xff]
    %v314 = vld [vmem:[%s309 + $0x20] sm:$0xff]
    %v315 = vld [vmem:[%s309 + $0x28] sm:$0xff]
    %v316 = vld [vmem:[%s309 + $0x30] sm:$0xff]
    %v317 = vld [vmem:[%s309 + $0x38] sm:$0xff]
    %v318 = vld [vmem:[%s309 + $0x40] sm:$0xff]
    %v319 = vld [vmem:[%s309 + $0x48] sm:$0xff]
    %v320 = vld [vmem:[%s309 + $0x50] sm:$0xff]
    %v321 = vld [vmem:[%s309 + $0x58] sm:$0xff]
    %v322 = vld [vmem:[%s309 + $0x60] sm:$0xff]
    %v323 = vld [vmem:[%s309 + $0x68] sm:$0xff]
    %v324 = vld [vmem:[%s309 + $0x70] sm:$0xff]
    %v325 = vld [vmem:[%s309 + $0x78] sm:$0xff]
    %v326 = vld [vmem:[%s309 + $0x80] sm:$0xff]
    %v327 = vld [vmem:[%s309 + $0x88] sm:$0xff]
    %v328 = vld [vmem:[%s309 + $0x90] sm:$0xff]
    %v329 = vld [vmem:[%s309 + $0x98] sm:$0xff]
    %v330 = vld [vmem:[%s309 + $0xa0] sm:$0xff]
    %v331 = vld [vmem:[%s309 + $0xa8] sm:$0xff]
    %v332 = vld [vmem:[%s309 + $0xb0] sm:$0xff]
    %v333 = vld [vmem:[%s309 + $0xb8] sm:$0xff]
    %v334 = vld [vmem:[%s309 + $0xc0] sm:$0xff]
    %v335 = vld [vmem:[%s309 + $0xc8] sm:$0xff]
    %v336 = vld [vmem:[%s309 + $0xd0] sm:$0xff]
    %v337 = vld [vmem:[%s309 + $0xd8] sm:$0xff]
    %v338 = vld [vmem:[%s309 + $0xe0] sm:$0xff]
    %v339 = vld [vmem:[%s309 + $0xe8] sm:$0xff]
    %v340 = vld [vmem:[%s309 + $0xf0] sm:$0xff]
    %v341 = vld [vmem:[%s309 + $0xf8] sm:$0xff]
    %s342 = scalar_lea.vmem %s2, 4
    %v343 = vld [vmem:[%s342] sm:$0x3]
    %v345 = vlaneseq
    %v346 = vshrl.u32 %v345, 7
    %v347 = vsub.s32 0, %v346
    %v348 = vrot.slane %v343, %v347
    %v349 = vlaneseq
    %v350 = vshrl.u32 %v349, 7
    %v351 = vsub.s32 1, %v350
    %v352 = vrot.slane %v343, %v351
    %355 = vmatprep.subr.mxu0 %v311
    %356 = vmatpush1.msra.mxu0 %v310
    %357 = vmatprep.subr.mxu0 %v313
    %358 = vmatpush1.msra.mxu0 %v312
    %359 = vmatprep.subr.mxu0 %v315
    %360 = vmatpush1.msra.mxu0 %v314
    %361 = vmatprep.subr.mxu0 %v317
    %362 = vmatpush1.msra.mxu0 %v316
    %363 = vmatprep.subr.mxu0 %v319
    %364 = vmatpush1.msra.mxu0 %v318
    %365 = vmatprep.subr.mxu0 %v321
    %366 = vmatpush1.msra.mxu0 %v320
    %367 = vmatprep.subr.mxu0 %v323
    %368 = vmatpush1.msra.mxu0 %v322
    %369 = vmatprep.subr.mxu0 %v325
    %370 = vmatpush1.msra.mxu0 %v324
    %371 = vmatprep.subr.mxu0 %v327
    %372 = vmatpush1.msra.mxu0 %v326
    %373 = vmatprep.subr.mxu0 %v329
    %374 = vmatpush1.msra.mxu0 %v328
    %375 = vmatprep.subr.mxu0 %v331
    %376 = vmatpush1.msra.mxu0 %v330
    %377 = vmatprep.subr.mxu0 %v333
    %378 = vmatpush1.msra.mxu0 %v332
    %379 = vmatprep.subr.mxu0 %v335
    %380 = vmatpush1.msra.mxu0 %v334
    %381 = vmatprep.subr.mxu0 %v337
    %382 = vmatpush1.msra.mxu0 %v336
    %383 = vmatprep.subr.mxu0 %v339
    %384 = vmatpush1.msra.mxu0 %v338
    %385 = vmatprep.subr.mxu0 %v341
    %386 = vmatpush1.msra.mxu0 %v340
    %387 = vmatprep.subr.mxu0 0.0
    %388 = vmatpush1.msra.mxu0 0.0
    %389 = vmatprep.subr.mxu0 0.0
    %390 = vmatpush1.msra.mxu0 0.0
    %391 = vmatprep.subr.mxu0 0.0
    %392 = vmatpush1.msra.mxu0 0.0
    %393 = vmatprep.subr.mxu0 0.0
    %394 = vmatpush1.msra.mxu0 0.0
    %395 = vmatprep.subr.mxu0 0.0
    %396 = vmatpush1.msra.mxu0 0.0
    %397 = vmatprep.subr.mxu0 0.0
    %398 = vmatpush1.msra.mxu0 0.0
    %399 = vmatprep.subr.mxu0 0.0
    %400 = vmatpush1.msra.mxu0 0.0
    %401 = vmatprep.subr.mxu0 0.0
    %402 = vmatpush1.msra.mxu0 0.0
    %403 = vmatprep.subr.mxu0 0.0
    %404 = vmatpush1.msra.mxu0 0.0
    %405 = vmatprep.subr.mxu0 0.0
    %406 = vmatpush1.msra.mxu0 0.0
    %407 = vmatprep.subr.mxu0 0.0
    %408 = vmatpush1.msra.mxu0 0.0
    %409 = vmatprep.subr.mxu0 0.0
    %410 = vmatpush1.msra.mxu0 0.0
    %411 = vmatprep.subr.mxu0 0.0
    %412 = vmatpush1.msra.mxu0 0.0
    %413 = vmatprep.subr.mxu0 0.0
    %414 = vmatpush1.msra.mxu0 0.0
    %415 = vmatprep.subr.mxu0 0.0
    %416 = vmatpush1.msra.mxu0 0.0
    %417 = vmatprep.subr.mxu0 0.0
    %418 = vmatpush1.msra.mxu0 0.0
    %419 = vmatprep.mubr.f32.mxu0 0.0
    %420 = vmatmul.mubr.f32.gmra.mrb[0].mxu0 %v308
    %v421 = vpop.f32.mrb[0].mxu0
    %v422 = vadd.f32 %v348, %v421
    %v423 = vpop.f32.mrb[0].mxu0
    %v424 = vadd.f32 %v352, %v423
    %425 = vdwg.mxu0
    %v426 = vmax.f32 %v422, 0.0
    %v427 = vmul.f32 %v424, 0.5
    %v428 = vtanh.pop %v427
    %v429 = vmul.f32 %v428, 0.5
    %v430 = vadd.f32 %v429, 0.5
    %v431 = vsub.f32 %v426, %v308
    %v432 = vmul.f32 %v430, %v431
    %v433 = vadd.f32 %v308, %v432
    %v434 = vld [vmem:[#allocation7] sm:$0xff]
    %v435 = vld [vmem:[#allocation7 + $0x8] sm:$0xff]
    %v436 = vld [vmem:[#allocation7 + $0x10] sm:$0xff]
    %v437 = vld [vmem:[#allocation7 + $0x18] sm:$0xff]
    %v438 = vld [vmem:[#allocation7 + $0x20] sm:$0xff]
    %v439 = vld [vmem:[#allocation7 + $0x28] sm:$0xff]
    %v440 = vld [vmem:[#allocation7 + $0x30] sm:$0xff]
    %v441 = vld [vmem:[#allocation7 + $0x38] sm:$0xff]
    %v442 = vld [vmem:[#allocation7 + $0x40] sm:$0xff]
    %v443 = vld [vmem:[#allocation7 + $0x48] sm:$0xff]
    %v444 = vld [vmem:[#allocation7 + $0x50] sm:$0xff]
    %v445 = vld [vmem:[#allocation7 + $0x58] sm:$0xff]
    %v446 = vld [vmem:[#allocation7 + $0x60] sm:$0xff]
    %v447 = vld [vmem:[#allocation7 + $0x68] sm:$0xff]
    %v448 = vld [vmem:[#allocation7 + $0x70] sm:$0xff]
    %v449 = vld [vmem:[#allocation7 + $0x78] sm:$0xff]
    %v450 = vld [vmem:[%s4] sm:$0x1]
    %v452 = vlaneseq
    %v453 = vshrl.u32 %v452, 7
    %v454 = vsub.s32 0, %v453
    %v455 = vrot.slane %v450, %v454
    %457 = vmatprep.subr.mxu0 0.0
    %458 = vmatpush1.msra.mxu0 %v434
    %459 = vmatprep.subr.mxu0 0.0
    %460 = vmatpush1.msra.mxu0 %v435
    %461 = vmatprep.subr.mxu0 0.0
    %462 = vmatpush1.msra.mxu0 %v436
    %463 = vmatprep.subr.mxu0 0.0
    %464 = vmatpush1.msra.mxu0 %v437
    %465 = vmatprep.subr.mxu0 0.0
    %466 = vmatpush1.msra.mxu0 %v438
    %467 = vmatprep.subr.mxu0 0.0
    %468 = vmatpush1.msra.mxu0 %v439
    %469 = vmatprep.subr.mxu0 0.0
    %470 = vmatpush1.msra.mxu0 %v440
    %471 = vmatprep.subr.mxu0 0.0
    %472 = vmatpush1.msra.mxu0 %v441
    %473 = vmatprep.subr.mxu0 0.0
    %474 = vmatpush1.msra.mxu0 %v442
    %475 = vmatprep.subr.mxu0 0.0
    %476 = vmatpush1.msra.mxu0 %v443
    %477 = vmatprep.subr.mxu0 0.0
    %478 = vmatpush1.msra.mxu0 %v444
    %479 = vmatprep.subr.mxu0 0.0
    %480 = vmatpush1.msra.mxu0 %v445
    %481 = vmatprep.subr.mxu0 0.0
    %482 = vmatpush1.msra.mxu0 %v446
    %483 = vmatprep.subr.mxu0 0.0
    %484 = vmatpush1.msra.mxu0 %v447
    %485 = vmatprep.subr.mxu0 0.0
    %486 = vmatpush1.msra.mxu0 %v448
    %487 = vmatprep.subr.mxu0 0.0
    %488 = vmatpush1.msra.mxu0 %v449
    %489 = vmatprep.subr.mxu0 0.0
    %490 = vmatpush1.msra.mxu0 0.0
    %491 = vmatprep.subr.mxu0 0.0
    %492 = vmatpush1.msra.mxu0 0.0
    %493 = vmatprep.subr.mxu0 0.0
    %494 = vmatpush1.msra.mxu0 0.0
    %495 = vmatprep.subr.mxu0 0.0
    %496 = vmatpush1.msra.mxu0 0.0
    %497 = vmatprep.subr.mxu0 0.0
    %498 = vmatpush1.msra.mxu0 0.0
    %499 = vmatprep.subr.mxu0 0.0
    %500 = vmatpush1.msra.mxu0 0.0
    %501 = vmatprep.subr.mxu0 0.0
    %502 = vmatpush1.msra.mxu0 0.0
    %503 = vmatprep.subr.mxu0 0.0
    %504 = vmatpush1.msra.mxu0 0.0
    %505 = vmatprep.subr.mxu0 0.0
    %506 = vmatpush1.msra.mxu0 0.0
    %507 = vmatprep.subr.mxu0 0.0
    %508 = vmatpush1.msra.mxu0 0.0
    %509 = vmatprep.subr.mxu0 0.0
    %510 = vmatpush1.msra.mxu0 0.0
    %511 = vmatprep.subr.mxu0 0.0
    %512 = vmatpush1.msra.mxu0 0.0
    %513 = vmatprep.subr.mxu0 0.0
    %514 = vmatpush1.msra.mxu0 0.0
    %515 = vmatprep.subr.mxu0 0.0
    %516 = vmatpush1.msra.mxu0 0.0
    %517 = vmatprep.subr.mxu0 0.0
    %518 = vmatpush1.msra.mxu0 0.0
    %519 = vmatprep.subr.mxu0 0.0
    %520 = vmatpush1.msra.mxu0 0.0
    %521 = vmatprep.mubr.f32.mxu0 0.0
    %522 = vmatmul.mubr.f32.gmra.mrb[0].mxu0 %v433
    %v523 = vpop.f32.mrb[0].mxu0
    %v524 = vadd.f32 %v455, %v523
    %v525 = vpop.f32.mrb[0].mxu0
    %526 = vdwg.mxu0
    %527 = vmax.xlane.f32.xlu0 %v524
    %v528 = vpop.xlane.xlu0 %527
    %v529 = vsub.f32 %v524, %v528
    %v530 = vmul.f32 %v529, 1.442695
    %v531 = vpow.pop %v530
    %532 = vadd.xlane.f32.xlu0 %v531
    %v533 = vpop.xlane.xlu0 %532
    %v534 = vrcp.pop %v533
    %v535 = vmul.f32 %v531, %v534
    %536 = vst [vmem:[#allocation8] sm:$0xff] %v535
    // Predicated region
    $region34: #{tpu_custom_call.1} parent=1 // pred_check
      _
    $region35: #{tpu_custom_call.1} parent=1 // pred_check_branch
      %538 = sbr.rel (0) target = $region37
    $region36: #{tpu_custom_call.1} parent=1 // pred_region
      %s540 = ssub.s32 128, 128
      %541 = vsyncadd [#allocation4], %s540
      %s543 = sshll.u32 [#allocation8], 4
      %s544 = int_to_ptr.vmem [resolvable:$true] %s543
      %546 = dma.vmem_to_hbm [thread:$0]  %s544, 128, %s5, [#allocation4]
    $region37: #{tpu_custom_call.1} parent=1 // pred_fallthru
      _
    // Predicated region
    $region38: #{tpu_custom_call.1} parent=1 // pred_check
      _
    $region39: #{tpu_custom_call.1} parent=1 // pred_check_branch
      %548 = sbr.rel (0) target = $region41
    $region40: #{tpu_custom_call.1} parent=1 // pred_region
      %549 = dma.done [#allocation4], 128
    $region41: #{tpu_custom_call.1} parent=1 // pred_fallthru
      _
    %550 = vsyncpa [#allocation3], 1
    %551 = vsyncpa [#allocation6], 1
    %552 = vsyncpa [#allocation4], 1

</llo_original>
